<compile_context>
chip_gen: v7x
topology: tpu7x:2x2x1
jax: 0.10.0
libtpu: 0.0.40
codegen_flags: <defaults>
</compile_context>

<pallas_src>
import math

import jax
import jax.numpy as jnp
from jax.experimental import pallas as pl
from jax.experimental.pallas import tpu as pltpu


def _round_up(a: int, b: int) -> int:
    return ((a + b - 1) // b) * b


def _round_down(a: int, b: int) -> int:
    return (a // b) * b


# --------------------------------- kernels ---------------------------------

def _fourier_mxu_kernel(xs_ref, r_ref, k_ref, p_ref, o_ref):
    """One output tile (MXU path).

    xs_ref: (rows, 3g) bf16   hi/mid/lo bf16 split of the folded time values
    r_ref:  (3g, L)   bf16    0/1 block-replication matrix (stacked 3x) -- resident
    k_ref:  (1, L)    f32     2*pi*[k|k] tiled per lane                 -- resident
    p_ref:  (1, L)    f32     phase: 0 on cos lanes, -pi/2 on sin lanes -- resident
    o_ref:  (rows, L)         lane-dense output tile
    """
    # MXU does the lane replication; products with 0/1 bf16 entries are exact and the
    # f32 accumulation of the 3 splits reconstructs x to <=1 ulp.
    x_rep = jnp.dot(xs_ref[...], r_ref[...], preferred_element_type=jnp.float32)
    # 1 mul + 1 add per element on the VPU (full f32), 1 cos per element on the EUP.
    f = x_rep * k_ref[...] + p_ref[...]
    o_ref[...] = jnp.cos(f).astype(o_ref.dtype)


def _fourier_vpu_kernel(x_ref, s_ref, p_ref, o_ref):
    """Fallback tile (previous validated VPU sum-of-broadcasts path)."""
    x = x_ref[...]                                  # (rows, g) f32
    s = s_ref[...]                                  # (g, L)    block-"diagonal" 2*pi*k
    g = x.shape[1]
    f = p_ref[...] + x[:, 0:1] * s[0:1, :]
    for j in range(1, g):
        f = f + x[:, j:j + 1] * s[j:j + 1, :]
    o_ref[...] = jnp.cos(f).astype(o_ref.dtype)


# --------------------------------- wrapper ---------------------------------

def fourier_features(x: jax.Array, kernel: jax.Array, *,
                     out_dtype=jnp.float32,
                     vmem_target_bytes: int = 14 * 1024 * 1024,
                     max_tile_rows: int = 32768,
                     use_mxu: bool = True) -> jax.Array:
    """Pallas implementation of FourierFeatures.forward (learnable=True).

    Args:
      x: (batch_dims..., 1) time values.
      kernel: (output_size // 2, 1) learnable kernel.
      out_dtype: float32 (module default) or bfloat16 (halves HBM writeback).
    Returns:
      (batch_dims..., output_size) fourier features in `out_dtype`.
    """
    assert x.shape[-1] == 1, "last dim of x must be 1"
    half = kernel.shape[0]
    assert half >= 1
    out_size = 2 * half

    batch_dims = x.shape[:-1]
    n = math.prod(batch_dims) if batch_dims else 1

    # Lane fold: g folded time values per output row, L = g*out_size a multiple of 128.
    g = 128 // math.gcd(out_size, 128)
    if g * out_size > 1024:          # awkward sizes: avoid a huge lcm (stores stay correct)
        g = 1
    L = g * out_size

    # ---- tiny per-lane constant patterns (built once, outside the kernel) ----
    k2pi = (2.0 * math.pi) * kernel.astype(jnp.float32).reshape(half)     # 2*pi folded here
    kblk = jnp.tile(jnp.concatenate([k2pi, k2pi]), g).reshape(1, L)       # (1, L) f32
    phase = jnp.tile(
        jnp.concatenate([jnp.zeros((half,), jnp.float32),
                         jnp.full((half,), -0.5 * math.pi, jnp.float32)]),
        g,
    ).reshape(1, L)                                                       # cos|sin phase

    # ---- tile sizing: large pipelined tiles, budgeted against double-buffered VMEM ----
    out_itemsize = jnp.dtype(out_dtype).itemsize
    bytes_out_row = L * out_itemsize
    bytes_x_row = _round_up(3 * g, 128) * 2            # lane-padded bf16 x buffer
    resident = 2 * (_round_up(3 * g, 16) * L * 2 + 2 * 8 * L * 4)
    m = -(-n // g)                                     # folded rows needed
    budget = max(vmem_target_bytes - resident, 1 << 20) // 2     # per buffer (double-buffered)
    tile_rows = budget // (bytes_out_row + bytes_x_row)
    tile_rows = min(tile_rows, max_tile_rows)
    # Keep >= ~4 grid steps when there is enough work (megacore sharding + pipelining).
    tile_rows = min(tile_rows, _round_up(-(-m // 4), 16))
    tile_rows = max(16, _round_down(tile_rows, 16))    # multiple of 16 (bf16 sublane pack)
    m_pad = _round_up(m, tile_rows)
    n_pad = m_pad * g
    grid = (m_pad // tile_rows,)

    x_flat = x.reshape(n).astype(jnp.float32)
    if n_pad != n:
        x_flat = jnp.pad(x_flat, (0, n_pad - n))       # zero pad; sliced off after the call

    out_shape = jax.ShapeDtypeStruct((m_pad, L), out_dtype)
    out_spec = pl.BlockSpec((tile_rows, L), lambda i: (i, 0))
    cparams = pltpu.CompilerParams(
        dimension_semantics=("parallel",),
        vmem_limit_bytes=32 * 1024 * 1024,
    )

    out_folded = None
    if use_mxu:
        # Exact 3-way bf16 split of x: xh + xm + xl == x exactly (tiny wrapper-side work,
        # x is 1/out_size the size of the output so the extra bytes are negligible).
        xh = x_flat.astype(jnp.bfloat16)
        r1 = x_flat - xh.astype(jnp.float32)
        xm = r1.astype(jnp.bfloat16)
        xl = (r1 - xm.astype(jnp.float32)).astype(jnp.bfloat16)
        x_split = jnp.concatenate(
            [xh.reshape(m_pad, g), xm.reshape(m_pad, g), xl.reshape(m_pad, g)], axis=1)
        # 0/1 block-replication matrix, stacked for the three splits: (3g, L).
        rep = jnp.repeat(jnp.eye(g, dtype=jnp.float32), out_size, axis=1)
        r3 = jnp.concatenate([rep, rep, rep], axis=0).astype(jnp.bfloat16)
        try:
            out_folded = pl.pallas_call(
                _fourier_mxu_kernel,
                out_shape=out_shape,
                grid=grid,
                in_specs=[
                    pl.BlockSpec((tile_rows, 3 * g), lambda i: (i, 0)),   # streamed rows
                    pl.BlockSpec((3 * g, L), lambda i: (0, 0)),           # resident pattern
                    pl.BlockSpec((1, L), lambda i: (0, 0)),               # resident 2*pi*k
                    pl.BlockSpec((1, L), lambda i: (0, 0)),               # resident phase
                ],
                out_specs=out_spec,
                compiler_params=cparams,
            )(x_split, r3, kblk, phase)
        except Exception:
            # Older Mosaic without unaligned small-K matmul masking -> validated VPU path.
            out_folded = None

    if out_folded is None:
        # Fallback: previous validated sum-of-broadcasts kernel (2*g VALU ops/elem).
        x_folded = x_flat.reshape(m_pad, g)
        kb = jnp.concatenate([k2pi, k2pi])                                 # (out_size,)
        if g > 1:
            eye = jnp.eye(g, dtype=jnp.float32)
            s_mat = (eye[:, :, None] * kb[None, None, :]).reshape(g, L)    # block "diagonal"
        else:
            s_mat = kb.reshape(1, L)
        out_folded = pl.pallas_call(
            _fourier_vpu_kernel,
            out_shape=out_shape,
            grid=grid,
            in_specs=[
                pl.BlockSpec((tile_rows, g), lambda i: (i, 0)),
                pl.BlockSpec((s_mat.shape[0], L), lambda i: (0, 0)),
                pl.BlockSpec((1, L), lambda i: (0, 0)),
            ],
            out_specs=out_spec,
            compiler_params=cparams,
        )(x_folded, s_mat, phase)

    # Un-fold (free reshape: identical HBM layout), drop padding, restore batch dims.
    out = out_folded.reshape(n_pad, out_size)[:n]
    return out.reshape(*batch_dims, out_size)


# ------------------------------- reference ---------------------------------

def _reference(x, kernel):
    # Elementwise (matmul-free) f32 reference: identical math, no dot-precision caveats.
    k = kernel.astype(jnp.float32).reshape(-1)                 # (half,)
    f = (2.0 * math.pi) * x.astype(jnp.float32) * k            # (..., 1)*(half,) -> (..., half)
    return jnp.concatenate([jnp.cos(f), jnp.sin(f)], axis=-1)


if __name__ == "__main__":
    output_size = 32
    key = jax.random.PRNGKey(0)
    k_key, x_key, x2_key = jax.random.split(key, 3)

    # Deterministic "learnable" kernel init: normal(0, 0.2), shape (half, 1).
    kernel = 0.2 * jax.random.normal(k_key, (output_size // 2, 1), dtype=jnp.float32)

    # Time values: (batch=2, seq=8, 1)
    x = jax.random.uniform(x_key, (2, 8, 1), dtype=jnp.float32)

    out = jax.block_until_ready(fourier_features(x, kernel))
    ref = _reference(x, kernel)
    assert out.shape == (2, 8, output_size), out.shape
    assert jnp.allclose(out, ref, atol=2e-5, rtol=1e-5), "mismatch vs reference (f32)"

    # Larger input: exercises the multi-step ("parallel") grid and row padding.
    x2 = jax.random.uniform(x2_key, (63, 1000, 1), dtype=jnp.float32)
    out2 = jax.block_until_ready(fourier_features(x2, kernel))
    assert out2.shape == (63, 1000, output_size), out2.shape
    assert jnp.allclose(out2, _reference(x2, kernel), atol=2e-5, rtol=1e-5), "mismatch (tiled)"

    # Optional bf16 writeback (halves HBM stores where the consumer allows it).
    out_bf16 = jax.block_until_ready(fourier_features(x, kernel, out_dtype=jnp.bfloat16))
    assert out_bf16.dtype == jnp.bfloat16
    assert jnp.allclose(out_bf16.astype(jnp.float32), ref, atol=1e-2), "mismatch (bf16)"

    print("KERNEL_OK")
</pallas_src>

<mosaic_0001>
module attributes {stable_mosaic.version = 11 : i64} {
  func.func @_fourier_mxu_kernel(%arg0: i32, %arg1: memref<16x12xbf16, #tpu.memory_space<vmem>>, %arg2: memref<12x128xbf16, #tpu.memory_space<vmem>>, %arg3: memref<1x128xf32, #tpu.memory_space<vmem>>, %arg4: memref<1x128xf32, #tpu.memory_space<vmem>>, %arg5: memref<16x128xf32, #tpu.memory_space<vmem>>) attributes {dimension_semantics = [#tpu.dimension_semantics<parallel>], iteration_bounds = array<i64: 1>, scalar_prefetch = 0 : i64, scratch_operands = 0 : i64, tpu.core_type = #tpu.core_type<tc>, window_params = [{transform_indices = @transform_0, window_bounds = array<i64: 16, 12>}, {pipeline_mode = #tpu.pipeline_mode<synchronous>, transform_indices = @transform_1, window_bounds = array<i64: 12, 128>}, {pipeline_mode = #tpu.pipeline_mode<synchronous>, transform_indices = @transform_2, window_bounds = array<i64: 1, 128>}, {pipeline_mode = #tpu.pipeline_mode<synchronous>, transform_indices = @transform_3, window_bounds = array<i64: 1, 128>}, {transform_indices = @transform_4, window_bounds = array<i64: 16, 128>}]} {
    %c0 = arith.constant 0 : index
    %c0_0 = arith.constant 0 : index
    %0 = vector.load %arg1[%c0, %c0_0] : memref<16x12xbf16, #tpu.memory_space<vmem>>, vector<16x12xbf16>
    %c0_1 = arith.constant 0 : index
    %c0_2 = arith.constant 0 : index
    %1 = vector.load %arg2[%c0_1, %c0_2] : memref<12x128xbf16, #tpu.memory_space<vmem>>, vector<12x128xbf16>
    %cst = arith.constant dense<0.000000e+00> : vector<16x128xf32>
    %2 = tpu.matmul %0, %1, %cst {dimension_numbers = #tpu.dot_dimension_numbers<[1], [0], [0], [1], [0, 0, 1, 1], [], []>} : vector<16x12xbf16>, vector<12x128xbf16>, vector<16x128xf32> -> vector<16x128xf32>
    %c0_3 = arith.constant 0 : index
    %c0_4 = arith.constant 0 : index
    %3 = vector.load %arg3[%c0_3, %c0_4] : memref<1x128xf32, #tpu.memory_space<vmem>>, vector<1x128xf32>
    %4 = vector.broadcast %3 : vector<1x128xf32> to vector<16x128xf32>
    %5 = arith.mulf %2, %4 : vector<16x128xf32>
    %c0_5 = arith.constant 0 : index
    %c0_6 = arith.constant 0 : index
    %6 = vector.load %arg4[%c0_5, %c0_6] : memref<1x128xf32, #tpu.memory_space<vmem>>, vector<1x128xf32>
    %7 = vector.broadcast %6 : vector<1x128xf32> to vector<16x128xf32>
    %8 = arith.addf %5, %7 : vector<16x128xf32>
    %9 = math.cos %8 : vector<16x128xf32>
    %c0_7 = arith.constant 0 : index
    %c0_8 = arith.constant 0 : index
    %10 = vector.load %arg5[%c0_7, %c0_8] : memref<16x128xf32, #tpu.memory_space<vmem>>, vector<16x128xf32>
    tpu.vector_store %arg5[%c0_7, %c0_8], %9 {strides = array<i32>} : memref<16x128xf32, #tpu.memory_space<vmem>>, vector<16x128xf32>,
    return
  }
  func.func @transform_0(%arg0: i32) -> (i32, i32) {
    %c0_i32 = arith.constant 0 : i32
    %c0_i32_0 = arith.constant 0 : i32
    return %arg0, %c0_i32 : i32, i32
  }
  func.func @transform_1(%arg0: i32) -> (i32, i32) {
    %c0_i32 = arith.constant 0 : i32
    %c0_i32_0 = arith.constant 0 : i32
    %c0_i32_1 = arith.constant 0 : i32
    return %c0_i32, %c0_i32_0 : i32, i32
  }
  func.func @transform_2(%arg0: i32) -> (i32, i32) {
    %c0_i32 = arith.constant 0 : i32
    %c0_i32_0 = arith.constant 0 : i32
    %c0_i32_1 = arith.constant 0 : i32
    return %c0_i32, %c0_i32_0 : i32, i32
  }
  func.func @transform_3(%arg0: i32) -> (i32, i32) {
    %c0_i32 = arith.constant 0 : i32
    %c0_i32_0 = arith.constant 0 : i32
    %c0_i32_1 = arith.constant 0 : i32
    return %c0_i32, %c0_i32_0 : i32, i32
  }
  func.func @transform_4(%arg0: i32) -> (i32, i32) {
    %c0_i32 = arith.constant 0 : i32
    %c0_i32_0 = arith.constant 0 : i32
    return %arg0, %c0_i32 : i32, i32
  }
}

module attributes {stable_mosaic.version = 11 : i64} {
  func.func @_fourier_vpu_kernel(%arg0: i32, %arg1: memref<16x4xf32, #tpu.memory_space<vmem>>, %arg2: memref<4x128xf32, #tpu.memory_space<vmem>>, %arg3: memref<1x128xf32, #tpu.memory_space<vmem>>, %arg4: memref<16x128xf32, #tpu.memory_space<vmem>>) attributes {dimension_semantics = [#tpu.dimension_semantics<parallel>], iteration_bounds = array<i64: 1>, scalar_prefetch = 0 : i64, scratch_operands = 0 : i64, tpu.core_type = #tpu.core_type<tc>, window_params = [{transform_indices = @transform_0, window_bounds = array<i64: 16, 4>}, {pipeline_mode = #tpu.pipeline_mode<synchronous>, transform_indices = @transform_1, window_bounds = array<i64: 4, 128>}, {pipeline_mode = #tpu.pipeline_mode<synchronous>, transform_indices = @transform_2, window_bounds = array<i64: 1, 128>}, {transform_indices = @transform_3, window_bounds = array<i64: 16, 128>}]} {
    %c0 = arith.constant 0 : index
    %c0_0 = arith.constant 0 : index
    %0 = vector.load %arg1[%c0, %c0_0] : memref<16x4xf32, #tpu.memory_space<vmem>>, vector<16x4xf32>
    %c0_1 = arith.constant 0 : index
    %c0_2 = arith.constant 0 : index
    %1 = vector.load %arg2[%c0_1, %c0_2] : memref<4x128xf32, #tpu.memory_space<vmem>>, vector<4x128xf32>
    %c0_3 = arith.constant 0 : index
    %c0_4 = arith.constant 0 : index
    %2 = vector.load %arg3[%c0_3, %c0_4] : memref<1x128xf32, #tpu.memory_space<vmem>>, vector<1x128xf32>
    %3 = vector.extract_strided_slice %0 {offsets = [0, 0], sizes = [16, 1], strides = [1, 1]} : vector<16x4xf32> to vector<16x1xf32>
    %4 = vector.extract_strided_slice %1 {offsets = [0, 0], sizes = [1, 128], strides = [1, 1]} : vector<4x128xf32> to vector<1x128xf32>
    %5 = vector.broadcast %3 : vector<16x1xf32> to vector<16x128xf32>
    %6 = vector.broadcast %4 : vector<1x128xf32> to vector<16x128xf32>
    %7 = arith.mulf %5, %6 : vector<16x128xf32>
    %8 = vector.broadcast %2 : vector<1x128xf32> to vector<16x128xf32>
    %9 = arith.addf %8, %7 : vector<16x128xf32>
    %10 = vector.extract_strided_slice %0 {offsets = [0, 1], sizes = [16, 1], strides = [1, 1]} : vector<16x4xf32> to vector<16x1xf32>
    %11 = vector.extract_strided_slice %1 {offsets = [1, 0], sizes = [1, 128], strides = [1, 1]} : vector<4x128xf32> to vector<1x128xf32>
    %12 = vector.broadcast %10 : vector<16x1xf32> to vector<16x128xf32>
    %13 = vector.broadcast %11 : vector<1x128xf32> to vector<16x128xf32>
    %14 = arith.mulf %12, %13 : vector<16x128xf32>
    %15 = arith.addf %9, %14 : vector<16x128xf32>
    %16 = vector.extract_strided_slice %0 {offsets = [0, 2], sizes = [16, 1], strides = [1, 1]} : vector<16x4xf32> to vector<16x1xf32>
    %17 = vector.extract_strided_slice %1 {offsets = [2, 0], sizes = [1, 128], strides = [1, 1]} : vector<4x128xf32> to vector<1x128xf32>
    %18 = vector.broadcast %16 : vector<16x1xf32> to vector<16x128xf32>
    %19 = vector.broadcast %17 : vector<1x128xf32> to vector<16x128xf32>
    %20 = arith.mulf %18, %19 : vector<16x128xf32>
    %21 = arith.addf %15, %20 : vector<16x128xf32>
    %22 = vector.extract_strided_slice %0 {offsets = [0, 3], sizes = [16, 1], strides = [1, 1]} : vector<16x4xf32> to vector<16x1xf32>
    %23 = vector.extract_strided_slice %1 {offsets = [3, 0], sizes = [1, 128], strides = [1, 1]} : vector<4x128xf32> to vector<1x128xf32>
    %24 = vector.broadcast %22 : vector<16x1xf32> to vector<16x128xf32>
    %25 = vector.broadcast %23 : vector<1x128xf32> to vector<16x128xf32>
    %26 = arith.mulf %24, %25 : vector<16x128xf32>
    %27 = arith.addf %21, %26 : vector<16x128xf32>
    %28 = math.cos %27 : vector<16x128xf32>
    %c0_5 = arith.constant 0 : index
    %c0_6 = arith.constant 0 : index
    %29 = vector.load %arg4[%c0_5, %c0_6] : memref<16x128xf32, #tpu.memory_space<vmem>>, vector<16x128xf32>
    tpu.vector_store %arg4[%c0_5, %c0_6], %28 {strides = array<i32>} : memref<16x128xf32, #tpu.memory_space<vmem>>, vector<16x128xf32>,
    return
  }
  func.func @transform_0(%arg0: i32) -> (i32, i32) {
    %c0_i32 = arith.constant 0 : i32
    %c0_i32_0 = arith.constant 0 : i32
    return %arg0, %c0_i32 : i32, i32
  }
  func.func @transform_1(%arg0: i32) -> (i32, i32) {
    %c0_i32 = arith.constant 0 : i32
    %c0_i32_0 = arith.constant 0 : i32
    %c0_i32_1 = arith.constant 0 : i32
    return %c0_i32, %c0_i32_0 : i32, i32
  }
  func.func @transform_2(%arg0: i32) -> (i32, i32) {
    %c0_i32 = arith.constant 0 : i32
    %c0_i32_0 = arith.constant 0 : i32
    %c0_i32_1 = arith.constant 0 : i32
    return %c0_i32, %c0_i32_0 : i32, i32
  }
  func.func @transform_3(%arg0: i32) -> (i32, i32) {
    %c0_i32 = arith.constant 0 : i32
    %c0_i32_0 = arith.constant 0 : i32
    return %arg0, %c0_i32 : i32, i32
  }
}

</mosaic_0001>

<llo_original>
// kernel: tpu_custom_call.1
$region0: #{tpu_custom_call.1}
  #allocation0 [shape = 'u32[]', space=smem, size = 0x4, offset = 0x4, fixed_abs, tag = 'smem constant byte address 0x4 - core index']
  #allocation1 [shape = 'u32[144,128]{1,0:T(1,128)}', space=vmem, size = 0x12000, scoped, tag = 'internal scratch']
  %s0 = inlined_call_operand.hbm [shape: bf16[16,12], index: 0, kind: input, shape index: {}]
  %s1 = inlined_call_operand.hbm [shape: bf16[12,128], index: 1, kind: input, shape index: {}]
  %s2 = inlined_call_operand.vmem [shape: f32[1,128], index: 2, kind: input, shape index: {}]
  %s3 = inlined_call_operand.vmem [shape: f32[1,128], index: 3, kind: input, shape index: {}]
  %s4 = inlined_call_operand.hbm [shape: f32[16,128], index: 4, kind: output, shape index: {}]
  %s5 = sld [smem:[#allocation0]]
  $region34: #{tpu_custom_call.1} parent=0
    _
  %s7 = ssub.s32 1, %s5
  %s8 = scalar_select 0, %s7, %s5
  $region1: #{tpu_custom_call.1} parent=0
    #allocation2 [shape = 'u8[4096]{0}', space=vmem, size = 0x1000, scoped, tag = 'input window, operand 0, single buffered']
    #allocation3 [shape = 's32[1]{0}', space=sflag, size = 0x4, scoped, tag = 'scoped memory for tpu_custom_call.1']
    #allocation4 [shape = 's32[1]{0}', space=sflag, size = 0x4, scoped, tag = 'scoped memory for tpu_custom_call.1']
    #allocation5 [shape = 'u8[4096]{0}', space=vmem, size = 0x1000, scoped, tag = 'input window, operand 1, single buffered']
    #allocation6 [shape = 's32[1]{0}', space=sflag, size = 0x4, scoped, tag = 'scoped memory for tpu_custom_call.1']
    #allocation7 [shape = 'u8[8192]{0}', space=vmem, size = 0x2000, scoped, tag = 'output window, operand 0, single buffered']
    %9 = vsyncpa [#allocation3], 0
    %10 = vsyncpa [#allocation6], 0
    %11 = vsyncpa [#allocation4], 0
    // Predicated region
    $region2: #{tpu_custom_call.1} parent=1 // pred_check
      _
    $region3: #{tpu_custom_call.1} parent=1 // pred_check_branch
      %13 = sbr.rel (0) target = $region5
    $region4: #{tpu_custom_call.1} parent=1 // pred_region
      %s15 = ssub.s32 128, 128
      %16 = vsyncadd [#allocation3], %s15
      %s17 = sshll.u32 [#allocation2], 4
      %s18 = int_to_ptr.vmem [resolvable:$true] %s17
      %23 = dma.hbm_to_vmem [thread:$0]  %s0, 128, %s18, [#allocation3], 64, 64, 4
    $region5: #{tpu_custom_call.1} parent=1 // pred_fallthru
      _
    // Predicated region
    $region6: #{tpu_custom_call.1} parent=1 // pred_check
      _
    $region7: #{tpu_custom_call.1} parent=1 // pred_check_branch
      %25 = sbr.rel (0) target = $region9
    $region8: #{tpu_custom_call.1} parent=1 // pred_region
      %s27 = ssub.s32 128, 128
      %28 = vsyncadd [#allocation6], %s27
      %s29 = sshll.u32 [#allocation5], 4
      %s30 = int_to_ptr.vmem [resolvable:$true] %s29
      %35 = dma.hbm_to_vmem [thread:$0]  %s1, 128, %s30, [#allocation6], 64, 64, 4
    $region9: #{tpu_custom_call.1} parent=1 // pred_fallthru
      _
    // Predicated region
    $region10: #{tpu_custom_call.1} parent=1 // pred_check
      _
    $region11: #{tpu_custom_call.1} parent=1 // pred_check_branch
      %37 = sbr.rel (0) target = $region13
    $region12: #{tpu_custom_call.1} parent=1 // pred_region
      _
    $region13: #{tpu_custom_call.1} parent=1 // pred_fallthru
      _
    // Predicated region
    $region14: #{tpu_custom_call.1} parent=1 // pred_check
      _
    $region15: #{tpu_custom_call.1} parent=1 // pred_check_branch
      %39 = sbr.rel (0) target = $region17
    $region16: #{tpu_custom_call.1} parent=1 // pred_region
      _
    $region17: #{tpu_custom_call.1} parent=1 // pred_fallthru
      _
    // Predicated region
    $region18: #{tpu_custom_call.1} parent=1 // pred_check
      _
    $region19: #{tpu_custom_call.1} parent=1 // pred_check_branch
      %41 = sbr.rel (0) target = $region21
    $region20: #{tpu_custom_call.1} parent=1 // pred_region
      %42 = dma.done [#allocation3], 128
    $region21: #{tpu_custom_call.1} parent=1 // pred_fallthru
      _
    // Predicated region
    $region22: #{tpu_custom_call.1} parent=1 // pred_check
      _
    $region23: #{tpu_custom_call.1} parent=1 // pred_check_branch
      %44 = sbr.rel (0) target = $region25
    $region24: #{tpu_custom_call.1} parent=1 // pred_region
      %45 = dma.done [#allocation6], 128
    $region25: #{tpu_custom_call.1} parent=1 // pred_fallthru
      _
    %v47 = vld [vmem:[#allocation2] sm:$0xf]
    %v48 = vld [vmem:[#allocation2 + $0x4] sm:$0xf]
    %v49 = vld [vmem:[#allocation5] sm:$0xf]
    %v50 = vld [vmem:[#allocation5 + $0x4] sm:$0x3]
    %v53 = vunpack.c.l.b16 %v47
    %v54 = vunpack.c.l.b16 %v48
    %v55 = vpack.c.b16 %v54, %v53
    %v58 = vunpack.c.l.b16 %v49
    %v59 = vunpack.c.l.b16 %v50
    %v60 = vpack.c.b16 %v59, %v58
    %vm61 = vcmask 97280
    %v63 = vsel %vm61, %v55, 0
    %vm65 = vcmask 1045504
    %v67 = vsel %vm65, %v60, 0
    %69 = vmatprep.subr.bf16.mxu0 0
    %70 = vmatpush1.bf16.msra.mxu0 %v67
    %71 = vmatprep.subr.bf16.mxu0 0
    %72 = vmatpush1.bf16.msra.mxu0 0
    %73 = vmatprep.subr.bf16.mxu0 0
    %74 = vmatpush1.bf16.msra.mxu0 0
    %75 = vmatprep.subr.bf16.mxu0 0
    %76 = vmatpush1.bf16.msra.mxu0 0
    %77 = vmatprep.subr.bf16.mxu0 0
    %78 = vmatpush1.bf16.msra.mxu0 0
    %79 = vmatprep.subr.bf16.mxu0 0
    %80 = vmatpush1.bf16.msra.mxu0 0
    %81 = vmatprep.subr.bf16.mxu0 0
    %82 = vmatpush1.bf16.msra.mxu0 0
    %83 = vmatprep.subr.bf16.mxu0 0
    %84 = vmatpush1.bf16.msra.mxu0 0
    %85 = vmatprep.subr.bf16.mxu0 0
    %86 = vmatpush1.bf16.msra.mxu0 0
    %87 = vmatprep.subr.bf16.mxu0 0
    %88 = vmatpush1.bf16.msra.mxu0 0
    %89 = vmatprep.subr.bf16.mxu0 0
    %90 = vmatpush1.bf16.msra.mxu0 0
    %91 = vmatprep.subr.bf16.mxu0 0
    %92 = vmatpush1.bf16.msra.mxu0 0
    %93 = vmatprep.subr.bf16.mxu0 0
    %94 = vmatpush1.bf16.msra.mxu0 0
    %95 = vmatprep.subr.bf16.mxu0 0
    %96 = vmatpush1.bf16.msra.mxu0 0
    %97 = vmatprep.subr.bf16.mxu0 0
    %98 = vmatpush1.bf16.msra.mxu0 0
    %99 = vmatprep.subr.bf16.mxu0 0
    %100 = vmatpush1.bf16.msra.mxu0 0
    %101 = vmatprep.mubr.bf16.mxu0 0
    %102 = vmatmul.mubr.bf16.gmra.mrb[0].mxu0 %v63
    %v103 = vpop.f32.mrb[0].mxu0
    %v104 = vadd.f32 0.0, %v103
    %v105 = vpop.f32.mrb[0].mxu0
    %v106 = vpop.f32.mrb[0].mxu0
    %v107 = vadd.f32 0.0, %v106
    %v108 = vpop.f32.mrb[0].mxu0
    %109 = vdwg.mxu0
    %v110 = vld [vmem:[%s2] sm:$0x1]
    %v112 = vlaneseq
    %v113 = vshrl.u32 %v112, 7
    %v114 = vsub.s32 0, %v113
    %v115 = vrot.slane %v110, %v114
    %v117 = vmul.f32 %v104, %v115
    %v118 = vmul.f32 %v107, %v115
    %v119 = vld [vmem:[%s3] sm:$0x1]
    %v121 = vlaneseq
    %v122 = vshrl.u32 %v121, 7
    %v123 = vsub.s32 0, %v122
    %v124 = vrot.slane %v119, %v123
    %v126 = vadd.f32 %v117, %v124
    %v127 = vadd.f32 %v118, %v124
    %v128 = vand.u32 2147483647, %v126
    %vm129 = vcmp.le.f32.partialorder %v128, 0.7853982
    %vm130 = vcmp.lt.s32.totalorder %v126, 0
    %v131 = vand.u32 %v126, 2139095040
    %v132 = vshrl.u32 %v131, 23
    %v133 = vsub.s32 %v132, 127
    %v134 = vand.u32 2147483647, %v126
    %v135 = vand.u32 %v134, 8388607
    %v136 = vor.u32 %v135, 8388608
    %v137 = vsub.s32 0, %v136
    %v138 = vadd.s32 %v133, 1
    %vm139 = vcmp.gt.s32.totalorder %v138, 0
    %v140 = vsel %vm139, %v138, 0
    %v141 = vshrl.u32 %v140, 5
    %v142 = vand.u32 %v140, 31
    %v143 = vsub.s32 32, %v142
    %v144 = vshrl.u32 683565275, %v143
    %v145 = vshll.u32 683565275, %v142
    %v146 = vshrl.u32 2475754826, %v143
    %v147 = vor.u32 %v145, %v146
    %v148 = vshll.u32 2475754826, %v142
    %v149 = vshrl.u32 2131351028, %v143
    %v150 = vor.u32 %v148, %v149
    %v151 = vshll.u32 2131351028, %v142
    %v152 = vshrl.u32 2102212464, %v143
    %v153 = vor.u32 %v151, %v152
    %v154 = vshll.u32 2102212464, %v142
    %v155 = vshrl.u32 920167782, %v143
    %v156 = vor.u32 %v154, %v155
    %v157 = vshll.u32 920167782, %v142
    %v158 = vshrl.u32 1326507024, %v143
    %v159 = vor.u32 %v157, %v158
    %vm160 = vcmp.lt.s32.totalorder %v141, 1
    %vm161 = vcmp.lt.s32.totalorder %v141, 2
    %vm162 = vcmp.lt.s32.totalorder %v141, 3
    %vm163 = vcmp.lt.s32.totalorder %v141, 4
    %v164 = vsel %vm160, %v144, %v147
    %v165 = vsel %vm163, %v153, 2102212464
    %v166 = vsel %vm162, %v150, %v165
    %v167 = vsel %vm161, %v164, %v166
    %v168 = vsel %vm160, %v147, %v150
    %v169 = vsel %vm163, %v156, 920167782
    %v170 = vsel %vm162, %v153, %v169
    %v171 = vsel %vm161, %v168, %v170
    %v172 = vsel %vm160, %v150, %v153
    %v173 = vsel %vm163, %v159, 1326507024
    %v174 = vsel %vm162, %v156, %v173
    %v175 = vsel %vm161, %v172, %v174
    %v176 = vshll.u32 %v136, 8
    %v177 = vmul.u32.u64.compose %v176, %v175
    %v178 = vextract.low.u32 %v177
    %v179 = vextract.high.u32 %v177
    %v180 = vmul.u32.u64.compose %v176, %v171
    %v181 = vextract.low.u32 %v180
    %v182 = vextract.high.u32 %v180
    %v183 = vmul.u32 %v176, %v167
    %v184 = vadd.s32 %v179, %v181
    %vm185 = vc.u32 %v179, %v181
    %v186 = vadd.s32 %v182, 1
    %v187 = vsel %vm185, %v186, %v182
    %v188 = vadd.s32 %v183, %v187
    %v189 = vadd.s32 %v188, 536870912
    %v190 = vshrl.u32 %v189, 30
    %v191 = vshll.u32 %v190, 30
    %v192 = vsub.s32 %v188, %v191
    %vm193 = vcmp.lt.s32.totalorder %v192, 0
    %v194 = vsub.s32 0, %v192
    %v195 = vsel %vm193, %v194, %v192
    %v196 = vclz %v195
    %v197 = vsub.s32 %v196, 2
    %vm198 = vcmp.gt.s32.totalorder 0, %v197
    %v199 = vsel %vm198, 0, %v197
    %v200 = vsub.s32 32, %v199
    %v201 = vshll.u32 %v192, %v199
    %v202 = vshrl.u32 %v184, %v200
    %v203 = vor.u32 %v201, %v202
    %v204 = vsub.s32 4294967266, %v199
    %v205 = vadd.s32 %v204, 127
    %v206 = vshll.u32 %v205, 23
    %v207 = vor.u32 4788187, %v206
    %v208 = vand.u32 2147483647, %v207
    %v210 = vcvt.s32.f32 %v203
    %v211 = vmul.f32 %v210, %v208
    %v212 = vxor.u32 %v211, 2147483648
    %v213 = vsel %vm130, %v212, %v211
    %v214 = vsub.s32 4, %v190
    %v215 = vsel %vm130, %v214, %v190
    %v216 = vsel %vm129, %v126, %v213
    %v217 = vsel %vm129, 0, %v215
    %v218 = vcosq.f32.pop %v216
    %v219 = vsinq.f32.pop %v216
    %vm220 = vweird.f32 %v126
    %v221 = vand.u32 %v217, 3
    %vm222 = vcmp.lt.s32.totalorder %v221, 2
    %vm223 = vcmp.eq.s32.totalorder %v221, 0
    %v224 = vxor.u32 %v219, 2147483648
    %v225 = vsel %vm223, %v218, %v224
    %vm226 = vcmp.eq.s32.totalorder %v221, 2
    %v227 = vxor.u32 %v218, 2147483648
    %v228 = vsel %vm226, %v227, %v219
    %v229 = vsel %vm222, %v225, %v228
    %v230 = vsel %vm220, nan, %v229
    %v231 = vand.u32 2147483647, %v127
    %vm232 = vcmp.le.f32.partialorder %v231, 0.7853982
    %vm233 = vcmp.lt.s32.totalorder %v127, 0
    %v234 = vand.u32 %v127, 2139095040
    %v235 = vshrl.u32 %v234, 23
    %v236 = vsub.s32 %v235, 127
    %v237 = vand.u32 2147483647, %v127
    %v238 = vand.u32 %v237, 8388607
    %v239 = vor.u32 %v238, 8388608
    %v240 = vsub.s32 0, %v239
    %v241 = vadd.s32 %v236, 1
    %vm242 = vcmp.gt.s32.totalorder %v241, 0
    %v243 = vsel %vm242, %v241, 0
    %v244 = vshrl.u32 %v243, 5
    %v245 = vand.u32 %v243, 31
    %v246 = vsub.s32 32, %v245
    %v247 = vshrl.u32 683565275, %v246
    %v248 = vshll.u32 683565275, %v245
    %v249 = vshrl.u32 2475754826, %v246
    %v250 = vor.u32 %v248, %v249
    %v251 = vshll.u32 2475754826, %v245
    %v252 = vshrl.u32 2131351028, %v246
    %v253 = vor.u32 %v251, %v252
    %v254 = vshll.u32 2131351028, %v245
    %v255 = vshrl.u32 2102212464, %v246
    %v256 = vor.u32 %v254, %v255
    %v257 = vshll.u32 2102212464, %v245
    %v258 = vshrl.u32 920167782, %v246
    %v259 = vor.u32 %v257, %v258
    %v260 = vshll.u32 920167782, %v245
    %v261 = vshrl.u32 1326507024, %v246
    %v262 = vor.u32 %v260, %v261
    %vm263 = vcmp.lt.s32.totalorder %v244, 1
    %vm264 = vcmp.lt.s32.totalorder %v244, 2
    %vm265 = vcmp.lt.s32.totalorder %v244, 3
    %vm266 = vcmp.lt.s32.totalorder %v244, 4
    %v267 = vsel %vm263, %v247, %v250
    %v268 = vsel %vm266, %v256, 2102212464
    %v269 = vsel %vm265, %v253, %v268
    %v270 = vsel %vm264, %v267, %v269
    %v271 = vsel %vm263, %v250, %v253
    %v272 = vsel %vm266, %v259, 920167782
    %v273 = vsel %vm265, %v256, %v272
    %v274 = vsel %vm264, %v271, %v273
    %v275 = vsel %vm263, %v253, %v256
    %v276 = vsel %vm266, %v262, 1326507024
    %v277 = vsel %vm265, %v259, %v276
    %v278 = vsel %vm264, %v275, %v277
    %v279 = vshll.u32 %v239, 8
    %v280 = vmul.u32.u64.compose %v279, %v278
    %v281 = vextract.low.u32 %v280
    %v282 = vextract.high.u32 %v280
    %v283 = vmul.u32.u64.compose %v279, %v274
    %v284 = vextract.low.u32 %v283
    %v285 = vextract.high.u32 %v283
    %v286 = vmul.u32 %v279, %v270
    %v287 = vadd.s32 %v282, %v284
    %vm288 = vc.u32 %v282, %v284
    %v289 = vadd.s32 %v285, 1
    %v290 = vsel %vm288, %v289, %v285
    %v291 = vadd.s32 %v286, %v290
    %v292 = vadd.s32 %v291, 536870912
    %v293 = vshrl.u32 %v292, 30
    %v294 = vshll.u32 %v293, 30
    %v295 = vsub.s32 %v291, %v294
    %vm296 = vcmp.lt.s32.totalorder %v295, 0
    %v297 = vsub.s32 0, %v295
    %v298 = vsel %vm296, %v297, %v295
    %v299 = vclz %v298
    %v300 = vsub.s32 %v299, 2
    %vm301 = vcmp.gt.s32.totalorder 0, %v300
    %v302 = vsel %vm301, 0, %v300
    %v303 = vsub.s32 32, %v302
    %v304 = vshll.u32 %v295, %v302
    %v305 = vshrl.u32 %v287, %v303
    %v306 = vor.u32 %v304, %v305
    %v307 = vsub.s32 4294967266, %v302
    %v308 = vadd.s32 %v307, 127
    %v309 = vshll.u32 %v308, 23
    %v310 = vor.u32 4788187, %v309
    %v311 = vand.u32 2147483647, %v310
    %v313 = vcvt.s32.f32 %v306
    %v314 = vmul.f32 %v313, %v311
    %v315 = vxor.u32 %v314, 2147483648
    %v316 = vsel %vm233, %v315, %v314
    %v317 = vsub.s32 4, %v293
    %v318 = vsel %vm233, %v317, %v293
    %v319 = vsel %vm232, %v127, %v316
    %v320 = vsel %vm232, 0, %v318
    %v321 = vcosq.f32.pop %v319
    %v322 = vsinq.f32.pop %v319
    %vm323 = vweird.f32 %v127
    %v324 = vand.u32 %v320, 3
    %vm325 = vcmp.lt.s32.totalorder %v324, 2
    %vm326 = vcmp.eq.s32.totalorder %v324, 0
    %v327 = vxor.u32 %v322, 2147483648
    %v328 = vsel %vm326, %v321, %v327
    %vm329 = vcmp.eq.s32.totalorder %v324, 2
    %v330 = vxor.u32 %v321, 2147483648
    %v331 = vsel %vm329, %v330, %v322
    %v332 = vsel %vm325, %v328, %v331
    %v333 = vsel %vm323, nan, %v332
    %334 = vst [vmem:[#allocation7] sm:$0xff] %v230
    %335 = vst [vmem:[#allocation7 + $0x8] sm:$0xff] %v333
    // Predicated region
    $region26: #{tpu_custom_call.1} parent=1 // pred_check
      _
    $region27: #{tpu_custom_call.1} parent=1 // pred_check_branch
      %337 = sbr.rel (0) target = $region29
    $region28: #{tpu_custom_call.1} parent=1 // pred_region
      %s339 = ssub.s32 256, 256
      %340 = vsyncadd [#allocation4], %s339
      %s341 = sshll.u32 [#allocation7], 4
      %s342 = int_to_ptr.vmem [resolvable:$true] %s341
      %347 = dma.vmem_to_hbm [thread:$0]  %s342, 256, %s4, [#allocation4], 128, 128, 8
    $region29: #{tpu_custom_call.1} parent=1 // pred_fallthru
      _
    // Predicated region
    $region30: #{tpu_custom_call.1} parent=1 // pred_check
      _
    $region31: #{tpu_custom_call.1} parent=1 // pred_check_branch
      %349 = sbr.rel (0) target = $region33
    $region32: #{tpu_custom_call.1} parent=1 // pred_region
      %350 = dma.done [#allocation4], 256
    $region33: #{tpu_custom_call.1} parent=1 // pred_fallthru
      _
    %351 = vsyncpa [#allocation3], 1
    %352 = vsyncpa [#allocation6], 1
    %353 = vsyncpa [#allocation4], 1

// kernel: tpu_custom_call.1
$region0: #{tpu_custom_call.1}
  #allocation0 [shape = 'u32[]', space=smem, size = 0x4, offset = 0x4, fixed_abs, tag = 'smem constant byte address 0x4 - core index']
  #allocation1 [shape = 'u32[144,128]{1,0:T(1,128)}', space=vmem, size = 0x12000, scoped, tag = 'internal scratch']
  %s0 = inlined_call_operand.vmem [shape: f32[16,4], index: 0, kind: input, shape index: {}]
  %s1 = inlined_call_operand.vmem [shape: f32[4,128], index: 1, kind: input, shape index: {}]
  %s2 = inlined_call_operand.vmem [shape: f32[1,128], index: 2, kind: input, shape index: {}]
  %s3 = inlined_call_operand.hbm [shape: f32[16,128], index: 3, kind: output, shape index: {}]
  %s4 = sld [smem:[#allocation0]]
  $region22: #{tpu_custom_call.1} parent=0
    _
  %s6 = ssub.s32 1, %s4
  %s7 = scalar_select 0, %s6, %s4
  $region1: #{tpu_custom_call.1} parent=0
    #allocation2 [shape = 'u8[8192]{0}', space=vmem, size = 0x2000, scoped, tag = 'output window, operand 0, single buffered']
    #allocation3 [shape = 's32[1]{0}', space=sflag, size = 0x4, scoped, tag = 'scoped memory for tpu_custom_call.1']
    %8 = vsyncpa [#allocation3], 0
    // Predicated region
    $region2: #{tpu_custom_call.1} parent=1 // pred_check
      _
    $region3: #{tpu_custom_call.1} parent=1 // pred_check_branch
      %10 = sbr.rel (0) target = $region5
    $region4: #{tpu_custom_call.1} parent=1 // pred_region
      _
    $region5: #{tpu_custom_call.1} parent=1 // pred_fallthru
      _
    // Predicated region
    $region6: #{tpu_custom_call.1} parent=1 // pred_check
      _
    $region7: #{tpu_custom_call.1} parent=1 // pred_check_branch
      %12 = sbr.rel (0) target = $region9
    $region8: #{tpu_custom_call.1} parent=1 // pred_region
      _
    $region9: #{tpu_custom_call.1} parent=1 // pred_fallthru
      _
    // Predicated region
    $region10: #{tpu_custom_call.1} parent=1 // pred_check
      _
    $region11: #{tpu_custom_call.1} parent=1 // pred_check_branch
      %14 = sbr.rel (0) target = $region13
    $region12: #{tpu_custom_call.1} parent=1 // pred_region
      _
    $region13: #{tpu_custom_call.1} parent=1 // pred_fallthru
      _
    %v15 = vld [vmem:[%s0] sm:$0xff]
    %v16 = vld [vmem:[%s0 + $0x8] sm:$0xff]
    %v17 = vld [vmem:[%s1] sm:$0xf]
    %v18 = vld [vmem:[%s2] sm:$0x1]
    %20 = vset.pattern.permute.xlu0 0
    %21 = vperm.xlu0 %20, %v15
    %v22 = vpop.permute.xlu0 %21
    %25 = vset.pattern.permute.xlu0 0
    %26 = vperm.xlu0 %25, %v16
    %v27 = vpop.permute.xlu0 %26
    %v29 = vlaneseq
    %v30 = vshrl.u32 %v29, 7
    %v31 = vsub.s32 0, %v30
    %v32 = vrot.slane %v17, %v31
    %v33 = vmul.f32 %v22, %v32
    %v34 = vmul.f32 %v27, %v32
    %v36 = vlaneseq
    %v37 = vshrl.u32 %v36, 7
    %v38 = vsub.s32 0, %v37
    %v39 = vrot.slane %v18, %v38
    %v41 = vadd.f32 %v39, %v33
    %v42 = vadd.f32 %v39, %v34
    %43 = vset.pattern.permute.xlu0 1
    %44 = vperm.xlu0 %43, %v15
    %v45 = vpop.permute.xlu0 %44
    %47 = vset.pattern.permute.xlu0 1
    %48 = vperm.xlu0 %47, %v16
    %v49 = vpop.permute.xlu0 %48
    %v51 = vlaneseq
    %v52 = vshrl.u32 %v51, 7
    %v53 = vsub.s32 1, %v52
    %v54 = vrot.slane %v17, %v53
    %v55 = vmul.f32 %v45, %v54
    %v56 = vmul.f32 %v49, %v54
    %v57 = vadd.f32 %v41, %v55
    %v58 = vadd.f32 %v42, %v56
    %59 = vset.pattern.permute.xlu0 2
    %60 = vperm.xlu0 %59, %v15
    %v61 = vpop.permute.xlu0 %60
    %63 = vset.pattern.permute.xlu0 2
    %64 = vperm.xlu0 %63, %v16
    %v65 = vpop.permute.xlu0 %64
    %v67 = vlaneseq
    %v68 = vshrl.u32 %v67, 7
    %v69 = vsub.s32 2, %v68
    %v70 = vrot.slane %v17, %v69
    %v71 = vmul.f32 %v61, %v70
    %v72 = vmul.f32 %v65, %v70
    %v73 = vadd.f32 %v57, %v71
    %v74 = vadd.f32 %v58, %v72
    %75 = vset.pattern.permute.xlu0 3
    %76 = vperm.xlu0 %75, %v15
    %v77 = vpop.permute.xlu0 %76
    %79 = vset.pattern.permute.xlu0 3
    %80 = vperm.xlu0 %79, %v16
    %v81 = vpop.permute.xlu0 %80
    %v83 = vlaneseq
    %v84 = vshrl.u32 %v83, 7
    %v85 = vsub.s32 3, %v84
    %v86 = vrot.slane %v17, %v85
    %v87 = vmul.f32 %v77, %v86
    %v88 = vmul.f32 %v81, %v86
    %v89 = vadd.f32 %v73, %v87
    %v90 = vadd.f32 %v74, %v88
    %v91 = vand.u32 2147483647, %v89
    %vm92 = vcmp.le.f32.partialorder %v91, 0.7853982
    %vm93 = vcmp.lt.s32.totalorder %v89, 0
    %v94 = vand.u32 %v89, 2139095040
    %v95 = vshrl.u32 %v94, 23
    %v96 = vsub.s32 %v95, 127
    %v97 = vand.u32 2147483647, %v89
    %v98 = vand.u32 %v97, 8388607
    %v99 = vor.u32 %v98, 8388608
    %v100 = vsub.s32 0, %v99
    %v101 = vadd.s32 %v96, 1
    %vm102 = vcmp.gt.s32.totalorder %v101, 0
    %v103 = vsel %vm102, %v101, 0
    %v104 = vshrl.u32 %v103, 5
    %v105 = vand.u32 %v103, 31
    %v106 = vsub.s32 32, %v105
    %v107 = vshrl.u32 683565275, %v106
    %v108 = vshll.u32 683565275, %v105
    %v109 = vshrl.u32 2475754826, %v106
    %v110 = vor.u32 %v108, %v109
    %v111 = vshll.u32 2475754826, %v105
    %v112 = vshrl.u32 2131351028, %v106
    %v113 = vor.u32 %v111, %v112
    %v114 = vshll.u32 2131351028, %v105
    %v115 = vshrl.u32 2102212464, %v106
    %v116 = vor.u32 %v114, %v115
    %v117 = vshll.u32 2102212464, %v105
    %v118 = vshrl.u32 920167782, %v106
    %v119 = vor.u32 %v117, %v118
    %v120 = vshll.u32 920167782, %v105
    %v121 = vshrl.u32 1326507024, %v106
    %v122 = vor.u32 %v120, %v121
    %vm123 = vcmp.lt.s32.totalorder %v104, 1
    %vm124 = vcmp.lt.s32.totalorder %v104, 2
    %vm125 = vcmp.lt.s32.totalorder %v104, 3
    %vm126 = vcmp.lt.s32.totalorder %v104, 4
    %v127 = vsel %vm123, %v107, %v110
    %v128 = vsel %vm126, %v116, 2102212464
    %v129 = vsel %vm125, %v113, %v128
    %v130 = vsel %vm124, %v127, %v129
    %v131 = vsel %vm123, %v110, %v113
    %v132 = vsel %vm126, %v119, 920167782
    %v133 = vsel %vm125, %v116, %v132
    %v134 = vsel %vm124, %v131, %v133
    %v135 = vsel %vm123, %v113, %v116
    %v136 = vsel %vm126, %v122, 1326507024
    %v137 = vsel %vm125, %v119, %v136
    %v138 = vsel %vm124, %v135, %v137
    %v139 = vshll.u32 %v99, 8
    %v140 = vmul.u32.u64.compose %v139, %v138
    %v141 = vextract.low.u32 %v140
    %v142 = vextract.high.u32 %v140
    %v143 = vmul.u32.u64.compose %v139, %v134
    %v144 = vextract.low.u32 %v143
    %v145 = vextract.high.u32 %v143
    %v146 = vmul.u32 %v139, %v130
    %v147 = vadd.s32 %v142, %v144
    %vm148 = vc.u32 %v142, %v144
    %v149 = vadd.s32 %v145, 1
    %v150 = vsel %vm148, %v149, %v145
    %v151 = vadd.s32 %v146, %v150
    %v152 = vadd.s32 %v151, 536870912
    %v153 = vshrl.u32 %v152, 30
    %v154 = vshll.u32 %v153, 30
    %v155 = vsub.s32 %v151, %v154
    %vm156 = vcmp.lt.s32.totalorder %v155, 0
    %v157 = vsub.s32 0, %v155
    %v158 = vsel %vm156, %v157, %v155
    %v159 = vclz %v158
    %v160 = vsub.s32 %v159, 2
    %vm161 = vcmp.gt.s32.totalorder 0, %v160
    %v162 = vsel %vm161, 0, %v160
    %v163 = vsub.s32 32, %v162
    %v164 = vshll.u32 %v155, %v162
    %v165 = vshrl.u32 %v147, %v163
    %v166 = vor.u32 %v164, %v165
    %v167 = vsub.s32 4294967266, %v162
    %v168 = vadd.s32 %v167, 127
    %v169 = vshll.u32 %v168, 23
    %v170 = vor.u32 4788187, %v169
    %v171 = vand.u32 2147483647, %v170
    %v173 = vcvt.s32.f32 %v166
    %v174 = vmul.f32 %v173, %v171
    %v175 = vxor.u32 %v174, 2147483648
    %v176 = vsel %vm93, %v175, %v174
    %v177 = vsub.s32 4, %v153
    %v178 = vsel %vm93, %v177, %v153
    %v179 = vsel %vm92, %v89, %v176
    %v180 = vsel %vm92, 0, %v178
    %v181 = vcosq.f32.pop %v179
    %v182 = vsinq.f32.pop %v179
    %vm183 = vweird.f32 %v89
    %v184 = vand.u32 %v180, 3
    %vm185 = vcmp.lt.s32.totalorder %v184, 2
    %vm186 = vcmp.eq.s32.totalorder %v184, 0
    %v187 = vxor.u32 %v182, 2147483648
    %v188 = vsel %vm186, %v181, %v187
    %vm189 = vcmp.eq.s32.totalorder %v184, 2
    %v190 = vxor.u32 %v181, 2147483648
    %v191 = vsel %vm189, %v190, %v182
    %v192 = vsel %vm185, %v188, %v191
    %v193 = vsel %vm183, nan, %v192
    %v194 = vand.u32 2147483647, %v90
    %vm195 = vcmp.le.f32.partialorder %v194, 0.7853982
    %vm196 = vcmp.lt.s32.totalorder %v90, 0
    %v197 = vand.u32 %v90, 2139095040
    %v198 = vshrl.u32 %v197, 23
    %v199 = vsub.s32 %v198, 127
    %v200 = vand.u32 2147483647, %v90
    %v201 = vand.u32 %v200, 8388607
    %v202 = vor.u32 %v201, 8388608
    %v203 = vsub.s32 0, %v202
    %v204 = vadd.s32 %v199, 1
    %vm205 = vcmp.gt.s32.totalorder %v204, 0
    %v206 = vsel %vm205, %v204, 0
    %v207 = vshrl.u32 %v206, 5
    %v208 = vand.u32 %v206, 31
    %v209 = vsub.s32 32, %v208
    %v210 = vshrl.u32 683565275, %v209
    %v211 = vshll.u32 683565275, %v208
    %v212 = vshrl.u32 2475754826, %v209
    %v213 = vor.u32 %v211, %v212
    %v214 = vshll.u32 2475754826, %v208
    %v215 = vshrl.u32 2131351028, %v209
    %v216 = vor.u32 %v214, %v215
    %v217 = vshll.u32 2131351028, %v208
    %v218 = vshrl.u32 2102212464, %v209
    %v219 = vor.u32 %v217, %v218
    %v220 = vshll.u32 2102212464, %v208
    %v221 = vshrl.u32 920167782, %v209
    %v222 = vor.u32 %v220, %v221
    %v223 = vshll.u32 920167782, %v208
    %v224 = vshrl.u32 1326507024, %v209
    %v225 = vor.u32 %v223, %v224
    %vm226 = vcmp.lt.s32.totalorder %v207, 1
    %vm227 = vcmp.lt.s32.totalorder %v207, 2
    %vm228 = vcmp.lt.s32.totalorder %v207, 3
    %vm229 = vcmp.lt.s32.totalorder %v207, 4
    %v230 = vsel %vm226, %v210, %v213
    %v231 = vsel %vm229, %v219, 2102212464
    %v232 = vsel %vm228, %v216, %v231
    %v233 = vsel %vm227, %v230, %v232
    %v234 = vsel %vm226, %v213, %v216
    %v235 = vsel %vm229, %v222, 920167782
    %v236 = vsel %vm228, %v219, %v235
    %v237 = vsel %vm227, %v234, %v236
    %v238 = vsel %vm226, %v216, %v219
    %v239 = vsel %vm229, %v225, 1326507024
    %v240 = vsel %vm228, %v222, %v239
    %v241 = vsel %vm227, %v238, %v240
    %v242 = vshll.u32 %v202, 8
    %v243 = vmul.u32.u64.compose %v242, %v241
    %v244 = vextract.low.u32 %v243
    %v245 = vextract.high.u32 %v243
    %v246 = vmul.u32.u64.compose %v242, %v237
    %v247 = vextract.low.u32 %v246
    %v248 = vextract.high.u32 %v246
    %v249 = vmul.u32 %v242, %v233
    %v250 = vadd.s32 %v245, %v247
    %vm251 = vc.u32 %v245, %v247
    %v252 = vadd.s32 %v248, 1
    %v253 = vsel %vm251, %v252, %v248
    %v254 = vadd.s32 %v249, %v253
    %v255 = vadd.s32 %v254, 536870912
    %v256 = vshrl.u32 %v255, 30
    %v257 = vshll.u32 %v256, 30
    %v258 = vsub.s32 %v254, %v257
    %vm259 = vcmp.lt.s32.totalorder %v258, 0
    %v260 = vsub.s32 0, %v258
    %v261 = vsel %vm259, %v260, %v258
    %v262 = vclz %v261
    %v263 = vsub.s32 %v262, 2
    %vm264 = vcmp.gt.s32.totalorder 0, %v263
    %v265 = vsel %vm264, 0, %v263
    %v266 = vsub.s32 32, %v265
    %v267 = vshll.u32 %v258, %v265
    %v268 = vshrl.u32 %v250, %v266
    %v269 = vor.u32 %v267, %v268
    %v270 = vsub.s32 4294967266, %v265
    %v271 = vadd.s32 %v270, 127
    %v272 = vshll.u32 %v271, 23
    %v273 = vor.u32 4788187, %v272
    %v274 = vand.u32 2147483647, %v273
    %v276 = vcvt.s32.f32 %v269
    %v277 = vmul.f32 %v276, %v274
    %v278 = vxor.u32 %v277, 2147483648
    %v279 = vsel %vm196, %v278, %v277
    %v280 = vsub.s32 4, %v256
    %v281 = vsel %vm196, %v280, %v256
    %v282 = vsel %vm195, %v90, %v279
    %v283 = vsel %vm195, 0, %v281
    %v284 = vcosq.f32.pop %v282
    %v285 = vsinq.f32.pop %v282
    %vm286 = vweird.f32 %v90
    %v287 = vand.u32 %v283, 3
    %vm288 = vcmp.lt.s32.totalorder %v287, 2
    %vm289 = vcmp.eq.s32.totalorder %v287, 0
    %v290 = vxor.u32 %v285, 2147483648
    %v291 = vsel %vm289, %v284, %v290
    %vm292 = vcmp.eq.s32.totalorder %v287, 2
    %v293 = vxor.u32 %v284, 2147483648
    %v294 = vsel %vm292, %v293, %v285
    %v295 = vsel %vm288, %v291, %v294
    %v296 = vsel %vm286, nan, %v295
    %297 = vst [vmem:[#allocation2] sm:$0xff] %v193
    %298 = vst [vmem:[#allocation2 + $0x8] sm:$0xff] %v296
    // Predicated region
    $region14: #{tpu_custom_call.1} parent=1 // pred_check
      _
    $region15: #{tpu_custom_call.1} parent=1 // pred_check_branch
      %300 = sbr.rel (0) target = $region17
    $region16: #{tpu_custom_call.1} parent=1 // pred_region
      %s302 = ssub.s32 256, 256
      %303 = vsyncadd [#allocation3], %s302
      %s304 = sshll.u32 [#allocation2], 4
      %s305 = int_to_ptr.vmem [resolvable:$true] %s304
      %310 = dma.vmem_to_hbm [thread:$0]  %s305, 256, %s3, [#allocation3], 128, 128, 8
    $region17: #{tpu_custom_call.1} parent=1 // pred_fallthru
      _
    // Predicated region
    $region18: #{tpu_custom_call.1} parent=1 // pred_check
      _
    $region19: #{tpu_custom_call.1} parent=1 // pred_check_branch
      %312 = sbr.rel (0) target = $region21
    $region20: #{tpu_custom_call.1} parent=1 // pred_region
      %313 = dma.done [#allocation3], 256
    $region21: #{tpu_custom_call.1} parent=1 // pred_fallthru
      _
    %314 = vsyncpa [#allocation3], 1

</llo_original>
